<compile_context>
chip_gen: v6e
topology: v6e:2x2x1
jax: 0.10.0
libtpu: 0.0.40
codegen_flags: <defaults>
</compile_context>

<pallas_src>
import jax
import jax.numpy as jnp
from jax.experimental import pallas as pl
from jax.experimental.pallas import tpu as pltpu


def _wrapped_model_kernel(xt_ref, ut_ref, w1xt_ref, w1ut_ref, b1t_ref,
                          w2t_ref, b2t_ref, out_ref):
    """Transposed-orientation fused MLP tile.

    xt_ref  : (D,     tile_m)  query-coordinate token slab (normalizer folded away)
    ut_ref  : (C_IN,  tile_m)  input-feature token slab
    w1xt    : (H, D)           first layer (query part), normalizer-folded, transposed
    w1ut    : (H, C_IN)        first layer (inputs part), transposed
    b1t     : (H, 1)
    w2t     : (C_OUT, H)       second layer, output-normalizer-folded, transposed
    b2t     : (C_OUT, 1)
    out     : (C_OUT, tile_m)  lane-dense output slab
    """
    # Layer 1: two MXU pushes accumulate into one (H, tile_m) activation.
    h = (jnp.dot(w1xt_ref[...], xt_ref[...], preferred_element_type=jnp.float32)
         + jnp.dot(w1ut_ref[...], ut_ref[...], preferred_element_type=jnp.float32)
         + b1t_ref[...])
    h = jnp.maximum(h, 0.0)  # ReLU
    # Layer 2: (C_OUT, H) @ (H, tile_m) -> (C_OUT, tile_m)  (lane-dense store).
    y = jnp.dot(w2t_ref[...], h, preferred_element_type=jnp.float32) + b2t_ref[...]
    out_ref[...] = y.astype(out_ref.dtype)


def wrapped_model_forward(x, inputs, params, *, tile_m=8192):
    """x: (B, N, D_COORD) query points, inputs: (B, N, C_IN) features.
    Returns (B, N, C_OUT)."""
    B, N, D = x.shape
    _, _, C_IN = inputs.shape
    H = params["w1x"].shape[1]
    C_OUT = params["w2"].shape[1]
    M = B * N

    # ---- tile sizing (primary tuning knob) -------------------------------
    # Big tiles amortize the ~0.35 us per-grid-step overhead; keep >= 2 grid
    # steps when M allows so the "parallel" axis can shard across v7x's 2 TCs.
    half_m = max(128, (((M + 1) // 2) + 127) // 128 * 128)
    tile_m = max(128, min((tile_m // 128) * 128, half_m))
    num_tiles = (M + tile_m - 1) // tile_m
    M_pad = num_tiles * tile_m

    # ---- fold normalizers into the MLP weights (once, f32, wrapper-side) --
    # NOTE: assumes q_std has no zeros (true for any sane Gaussian normalizer).
    f32 = jnp.float32
    q_mean = params["q_mean"].astype(f32)          # (1, D)
    q_std = params["q_std"].astype(f32)            # (1, D)
    w1x = params["w1x"].astype(f32)                # (D, H)
    w1u = params["w1u"].astype(f32)                # (C_IN, H)
    b1 = params["b1"].astype(f32)                  # (1, H)
    w2 = params["w2"].astype(f32)                  # (H, C_OUT)
    b2 = params["b2"].astype(f32)                  # (1, C_OUT)
    o_mean = params["o_mean"].astype(f32)          # (1, C_OUT)
    o_std = params["o_std"].astype(f32)            # (1, C_OUT)

    w1x_eff = w1x / q_std.T                        # (D, H)   query normalizer folded
    b1_eff = b1 - (q_mean / q_std) @ w1x           # (1, H)
    w2_eff = w2 * o_std                            # (H, C_OUT) output normalizer folded
    b2_eff = b2 * o_std + o_mean                   # (1, C_OUT)

    # Transposed parameter orientation (channels on sublanes, tokens on lanes).
    w1xt = jnp.asarray(w1x_eff.T)                  # (H, D)
    w1ut = jnp.asarray(w1u.T)                      # (H, C_IN)
    b1t = jnp.asarray(b1_eff.T)                    # (H, 1)
    w2t = jnp.asarray(w2_eff.T)                    # (C_OUT, H)
    b2t = jnp.asarray(b2_eff.T)                    # (C_OUT, 1)

    # ---- two transposed token streams (no concat materialization) ---------
    # (optional: store the streams as bf16 to halve HBM read traffic on
    #  v6e/v7x if accuracy permits; kept f32 here to match the reference.)
    xt = x.reshape(M, D).astype(f32).T             # (D, M)
    ut = inputs.reshape(M, C_IN).astype(f32).T     # (C_IN, M)
    if M_pad > M:
        xt = jnp.pad(xt, ((0, 0), (0, M_pad - M)))  # zero-pad ragged last tile
        ut = jnp.pad(ut, ((0, 0), (0, M_pad - M)))

    # ---- cost estimate (helps XLA overlap this tiny custom call) ----------
    K = D + C_IN
    flops = 2 * M_pad * K * H + 2 * M_pad * H * C_OUT
    bytes_accessed = 4 * (M_pad * (K + C_OUT) + K * H + H + H * C_OUT + C_OUT)
    cost = pl.CostEstimate(flops=flops, transcendentals=0,
                           bytes_accessed=bytes_accessed)

    out_t = pl.pallas_call(
        _wrapped_model_kernel,
        out_shape=jax.ShapeDtypeStruct((C_OUT, M_pad), jnp.float32),
        grid=(num_tiles,),
        in_specs=[
            pl.BlockSpec((D, tile_m), lambda i: (0, i)),       # xt (token stream)
            pl.BlockSpec((C_IN, tile_m), lambda i: (0, i)),    # ut (token stream)
            pl.BlockSpec((H, D), lambda i: (0, 0)),            # w1xt (VMEM-resident)
            pl.BlockSpec((H, C_IN), lambda i: (0, 0)),         # w1ut
            pl.BlockSpec((H, 1), lambda i: (0, 0)),            # b1t
            pl.BlockSpec((C_OUT, H), lambda i: (0, 0)),        # w2t
            pl.BlockSpec((C_OUT, 1), lambda i: (0, 0)),        # b2t
        ],
        out_specs=pl.BlockSpec((C_OUT, tile_m), lambda i: (0, i)),
        compiler_params=pltpu.CompilerParams(
            dimension_semantics=("parallel",)),
        cost_estimate=cost,
    )(xt, ut, w1xt, w1ut, b1t, w2t, b2t)

    # (C_OUT, M_pad) -> (B, N, C_OUT); layout plumbing only (tiny output).
    return out_t[:, :M].T.reshape(B, N, C_OUT)


def _reference_forward(x, inputs, p):
    """Pure-JAX reference of the same wrapped_model forward (unfused form)."""
    xn = (x - p["q_mean"]) / p["q_std"]
    h = jnp.maximum(xn @ p["w1x"] + inputs @ p["w1u"] + p["b1"], 0.0)
    y = h @ p["w2"] + p["b2"]
    return y * p["o_std"] + p["o_mean"]


if __name__ == "__main__":
    # Small, deterministic shapes.
    B, N = 2, 256          # batch, query points per sample  (B*N = 512 tokens)
    D_COORD = 2            # query coordinate dim (x, y)
    C_IN = 4               # input field channels
    H = 32                 # hidden width of the synthetic inner model
    C_OUT = 1              # output channels (e.g. vorticity)

    key = jax.random.PRNGKey(0)
    kx, ku, k1, k2, k3, k4 = jax.random.split(key, 6)

    x = jax.random.uniform(kx, (B, N, D_COORD), dtype=jnp.float32)
    inputs = jax.random.normal(ku, (B, N, C_IN), dtype=jnp.float32)

    # Deterministic parameter / normalizer initialization (synthetic; no checkpoint).
    params = {
        "q_mean": jnp.full((1, D_COORD), 0.5, jnp.float32),
        "q_std":  jnp.full((1, D_COORD), 0.29, jnp.float32),
        "w1x": 0.1 * jax.random.normal(k1, (D_COORD, H), dtype=jnp.float32),
        "w1u": 0.1 * jax.random.normal(k2, (C_IN, H), dtype=jnp.float32),
        "b1":  jnp.zeros((1, H), jnp.float32),
        "w2":  0.1 * jax.random.normal(k3, (H, C_OUT), dtype=jnp.float32),
        "b2":  0.01 * jax.random.normal(k4, (1, C_OUT), dtype=jnp.float32),
        "o_mean": jnp.full((1, C_OUT), 0.03, jnp.float32),
        "o_std":  jnp.full((1, C_OUT), 1.7, jnp.float32),
    }

    out = wrapped_model_forward(x, inputs, params)
    out = jax.block_until_ready(out)

    ref = _reference_forward(x.reshape(-1, D_COORD),
                             inputs.reshape(-1, C_IN),
                             params).reshape(B, N, C_OUT)
    assert out.shape == (B, N, C_OUT)
    # Slightly looser tolerance than ulp: normalizer folding changes the
    # rounding order relative to the unfused reference.
    assert jnp.allclose(out, ref, atol=1e-4, rtol=1e-4)

    print("KERNEL_OK")
</pallas_src>

<mosaic_0001>
module attributes {stable_mosaic.version = 11 : i64} {
  func.func @_wrapped_model_kernel(%arg0: i32, %arg1: memref<2x256xf32, #tpu.memory_space<vmem>>, %arg2: memref<4x256xf32, #tpu.memory_space<vmem>>, %arg3: memref<32x2xf32, #tpu.memory_space<vmem>>, %arg4: memref<32x4xf32, #tpu.memory_space<vmem>>, %arg5: memref<32x1xf32, #tpu.memory_space<vmem>>, %arg6: memref<1x32xf32, #tpu.memory_space<vmem>>, %arg7: memref<1x1xf32, #tpu.memory_space<vmem>>, %arg8: memref<1x256xf32, #tpu.memory_space<vmem>>) attributes {dimension_semantics = [#tpu.dimension_semantics<parallel>], iteration_bounds = array<i64: 2>, scalar_prefetch = 0 : i64, scratch_operands = 0 : i64, tpu.core_type = #tpu.core_type<tc>, window_params = [{transform_indices = @transform_0, window_bounds = array<i64: 2, 256>}, {transform_indices = @transform_1, window_bounds = array<i64: 4, 256>}, {pipeline_mode = #tpu.pipeline_mode<synchronous>, transform_indices = @transform_2, window_bounds = array<i64: 32, 2>}, {pipeline_mode = #tpu.pipeline_mode<synchronous>, transform_indices = @transform_3, window_bounds = array<i64: 32, 4>}, {pipeline_mode = #tpu.pipeline_mode<synchronous>, transform_indices = @transform_4, window_bounds = array<i64: 32, 1>}, {pipeline_mode = #tpu.pipeline_mode<synchronous>, transform_indices = @transform_5, window_bounds = array<i64: 1, 32>}, {pipeline_mode = #tpu.pipeline_mode<synchronous>, transform_indices = @transform_6, window_bounds = array<i64: 1, 1>}, {transform_indices = @transform_7, window_bounds = array<i64: 1, 256>}]} {
    %c0 = arith.constant 0 : index
    %c0_0 = arith.constant 0 : index
    %0 = vector.load %arg3[%c0, %c0_0] : memref<32x2xf32, #tpu.memory_space<vmem>>, vector<32x2xf32>
    %c0_1 = arith.constant 0 : index
    %c0_2 = arith.constant 0 : index
    %1 = vector.load %arg1[%c0_1, %c0_2] : memref<2x256xf32, #tpu.memory_space<vmem>>, vector<2x256xf32>
    %cst = arith.constant dense<0.000000e+00> : vector<32x256xf32>
    %2 = tpu.matmul %0, %1, %cst {dimension_numbers = #tpu.dot_dimension_numbers<[1], [0], [0], [1], [0, 0, 1, 1], [], []>} : vector<32x2xf32>, vector<2x256xf32>, vector<32x256xf32> -> vector<32x256xf32>
    %c0_3 = arith.constant 0 : index
    %c0_4 = arith.constant 0 : index
    %3 = vector.load %arg4[%c0_3, %c0_4] : memref<32x4xf32, #tpu.memory_space<vmem>>, vector<32x4xf32>
    %c0_5 = arith.constant 0 : index
    %c0_6 = arith.constant 0 : index
    %4 = vector.load %arg2[%c0_5, %c0_6] : memref<4x256xf32, #tpu.memory_space<vmem>>, vector<4x256xf32>
    %cst_7 = arith.constant dense<0.000000e+00> : vector<32x256xf32>
    %5 = tpu.matmul %3, %4, %cst_7 {dimension_numbers = #tpu.dot_dimension_numbers<[1], [0], [0], [1], [0, 0, 1, 1], [], []>} : vector<32x4xf32>, vector<4x256xf32>, vector<32x256xf32> -> vector<32x256xf32>
    %6 = arith.addf %2, %5 : vector<32x256xf32>
    %c0_8 = arith.constant 0 : index
    %c0_9 = arith.constant 0 : index
    %7 = vector.load %arg5[%c0_8, %c0_9] : memref<32x1xf32, #tpu.memory_space<vmem>>, vector<32x1xf32>
    %8 = vector.broadcast %7 : vector<32x1xf32> to vector<32x256xf32>
    %9 = arith.addf %6, %8 : vector<32x256xf32>
    %cst_10 = arith.constant 0.000000e+00 : f32
    %10 = vector.broadcast %cst_10 : f32 to vector<32x256xf32>
    %11 = arith.maximumf %9, %10 : vector<32x256xf32>
    %c0_11 = arith.constant 0 : index
    %c0_12 = arith.constant 0 : index
    %12 = vector.load %arg6[%c0_11, %c0_12] : memref<1x32xf32, #tpu.memory_space<vmem>>, vector<1x32xf32>
    %cst_13 = arith.constant dense<0.000000e+00> : vector<1x256xf32>
    %13 = tpu.matmul %12, %11, %cst_13 {dimension_numbers = #tpu.dot_dimension_numbers<[1], [0], [0], [1], [0, 0, 1, 1], [], []>} : vector<1x32xf32>, vector<32x256xf32>, vector<1x256xf32> -> vector<1x256xf32>
    %c0_14 = arith.constant 0 : index
    %c0_15 = arith.constant 0 : index
    %14 = vector.load %arg7[%c0_14, %c0_15] : memref<1x1xf32, #tpu.memory_space<vmem>>, vector<1x1xf32>
    %15 = vector.broadcast %14 : vector<1x1xf32> to vector<1x256xf32>
    %16 = arith.addf %13, %15 : vector<1x256xf32>
    %c0_16 = arith.constant 0 : index
    %c0_17 = arith.constant 0 : index
    %17 = vector.load %arg8[%c0_16, %c0_17] : memref<1x256xf32, #tpu.memory_space<vmem>>, vector<1x256xf32>
    tpu.vector_store %arg8[%c0_16, %c0_17], %16 {strides = array<i32>} : memref<1x256xf32, #tpu.memory_space<vmem>>, vector<1x256xf32>,
    return
  }
  func.func @transform_0(%arg0: i32) -> (i32, i32) {
    %c0_i32 = arith.constant 0 : i32
    %c0_i32_0 = arith.constant 0 : i32
    return %c0_i32, %arg0 : i32, i32
  }
  func.func @transform_1(%arg0: i32) -> (i32, i32) {
    %c0_i32 = arith.constant 0 : i32
    %c0_i32_0 = arith.constant 0 : i32
    return %c0_i32, %arg0 : i32, i32
  }
  func.func @transform_2(%arg0: i32) -> (i32, i32) {
    %c0_i32 = arith.constant 0 : i32
    %c0_i32_0 = arith.constant 0 : i32
    %c0_i32_1 = arith.constant 0 : i32
    return %c0_i32, %c0_i32_0 : i32, i32
  }
  func.func @transform_3(%arg0: i32) -> (i32, i32) {
    %c0_i32 = arith.constant 0 : i32
    %c0_i32_0 = arith.constant 0 : i32
    %c0_i32_1 = arith.constant 0 : i32
    return %c0_i32, %c0_i32_0 : i32, i32
  }
  func.func @transform_4(%arg0: i32) -> (i32, i32) {
    %c0_i32 = arith.constant 0 : i32
    %c0_i32_0 = arith.constant 0 : i32
    %c0_i32_1 = arith.constant 0 : i32
    return %c0_i32, %c0_i32_0 : i32, i32
  }
  func.func @transform_5(%arg0: i32) -> (i32, i32) {
    %c0_i32 = arith.constant 0 : i32
    %c0_i32_0 = arith.constant 0 : i32
    %c0_i32_1 = arith.constant 0 : i32
    return %c0_i32, %c0_i32_0 : i32, i32
  }
  func.func @transform_6(%arg0: i32) -> (i32, i32) {
    %c0_i32 = arith.constant 0 : i32
    %c0_i32_0 = arith.constant 0 : i32
    %c0_i32_1 = arith.constant 0 : i32
    return %c0_i32, %c0_i32_0 : i32, i32
  }
  func.func @transform_7(%arg0: i32) -> (i32, i32) {
    %c0_i32 = arith.constant 0 : i32
    %c0_i32_0 = arith.constant 0 : i32
    return %c0_i32, %arg0 : i32, i32
  }
}

</mosaic_0001>

<llo_original>
// kernel: tpu_custom_call.1
$region0: #{tpu_custom_call.1}
  #allocation0 [shape = 'u32[]', space=smem, size = 0x4, offset = 0x4, fixed_abs, tag = 'smem constant byte address 0x4 - core index']
  #allocation1 [shape = 'u32[144,128]{1,0:T(1,128)}', space=vmem, size = 0x12000, scoped, tag = 'internal scratch']
  #allocation2 [shape = 'f32[1,1]{1,0:T(1,128)S(1)}', space=vmem, size = 0x200, scoped, tag = 'scoped memory for tpu_custom_call.1']
  %s0 = inlined_call_operand.vmem [shape: f32[2,512], index: 0, kind: input, shape index: {}]
  %s1 = inlined_call_operand.vmem [shape: f32[4,512], index: 1, kind: input, shape index: {}]
  %s2 = inlined_call_operand.vmem [shape: f32[32,2], index: 2, kind: input, shape index: {}]
  %s3 = inlined_call_operand.vmem [shape: f32[32,4], index: 3, kind: input, shape index: {}]
  %s4 = inlined_call_operand.vmem [shape: f32[32,1], index: 4, kind: input, shape index: {}]
  %s5 = inlined_call_operand.vmem [shape: f32[1,32], index: 5, kind: input, shape index: {}]
  %s6 = inlined_call_operand.<no memory space> [shape: f32[1,1], index: 6, kind: input, shape index: {}]
  %s7 = inlined_call_operand.hbm [shape: f32[1,512], index: 7, kind: output, shape index: {}]
  %s8 = sld [smem:[#allocation0]]
  $region61: #{tpu_custom_call.1} parent=0
    _
  %s10 = ssub.s32 1, %s8
  %s11 = scalar_select 0, %s10, %s8
  %v12 = vstv %s6
  %13 = vst [vmem:[#allocation2] sm:$0x1] %v12
  $region1: #{tpu_custom_call.1} parent=0
    #allocation3 [shape = 'u8[2048]{0}', space=vmem, size = 0x800, scoped, tag = 'output window, operand 0']
    #allocation4 [shape = 's32[2]{0}', space=sflag, size = 0x8, scoped, tag = 'scoped memory for tpu_custom_call.1']
    %14 = vsyncpa [#allocation4], 0
    %s15 = scalar_lea.sflag [#allocation4], 1
    %16 = vsyncpa %s15, 0
    loop: start=0, step=1, limit=4
    $region2: #{tpu_custom_call.1} parent=1 // loop_pre_header
      _
    $region3: #{tpu_custom_call.1} parent=1 // loop_header
      %s18 = sphi 0, %s22
      %p19 = scmp.ge.s32.totalorder %s18, 4
      %s28 = sphi 0, %s30
      %s31 = sphi 0, %s28
      %s32 = sphi 0, %s31
      %s48 = sphi 0, %s32
      %s54 = sphi 0, %s56
      %s57 = sphi 0, %s54
      %s58 = sphi 0, %s57
      %s74 = sphi 0, %s58
      %s78 = sphi 0, %s78
      %s80 = sphi 0, %s78
      %s81 = sphi 0, %s80
      %s95 = sphi 0, %s81
      %s99 = sphi 0, %s99
      %s101 = sphi 0, %s99
      %s102 = sphi 0, %s101
      %s116 = sphi 0, %s102
      %s120 = sphi 0, %s120
      %s122 = sphi 0, %s120
      %s123 = sphi 0, %s122
      %s137 = sphi 0, %s123
      %s141 = sphi 0, %s141
      %s143 = sphi 0, %s141
      %s144 = sphi 0, %s143
      %s158 = sphi 0, %s144
      %s162 = sphi 0, %s162
      %s164 = sphi 0, %s162
      %s165 = sphi 0, %s164
      %s179 = sphi 0, %s165
      %s185 = sphi 0, %s187
      %s188 = sphi 0, %s185
      %s189 = sphi 0, %s188
      %s205 = sphi 0, %s189
    $region4: #{tpu_custom_call.1} parent=1 // loop_header_branch
      %21 = sbr.rel (%p19) target = $region8
    $region5: #{tpu_custom_call.1} parent=1 // loop_body
      %s23 = ssub.s32 %s18, 1
      %s24 = ssub.s32 %s18, 2
      %s25 = sadd.s32 %s18, 1
      %s26 = ssub.s32 %s18, %s25
      %p27 = scmp.eq.s32.totalorder %s26, 0
      %s29 = sadd.s32 %s28, 1
      %s30 = scalar_select %p27, %s28, %s29
      %p33 = pneg %p27
      %p34 = scmp.eq.s32.totalorder %s18, 1
      %p35 = por %p33, %p34
      %p36 = scmp.ne.s32.totalorder %s28, %s31
      %p37 = scmp.eq.s32.totalorder %s18, 0
      %p38 = por %p36, %p37
      %p39 = scmp.ne.s32.totalorder %s28, %s31
      %p40 = scmp.eq.s32.totalorder %s23, 1
      %p41 = por %p39, %p40
      %p42 = scmp.ne.s32.totalorder %s31, %s32
      %p43 = scmp.eq.s32.totalorder %s23, 0
      %p44 = por %p42, %p43
      %p45 = scmp.ne.s32.totalorder %s31, %s32
      %p46 = scmp.eq.s32.totalorder %s24, 1
      %p47 = por %p45, %p46
      %p49 = scmp.ne.s32.totalorder %s32, %s48
      %p50 = scmp.eq.s32.totalorder %s24, 0
      %p51 = por %p49, %p50
      %s52 = ssub.s32 %s18, %s25
      %p53 = scmp.eq.s32.totalorder %s52, 0
      %s55 = sadd.s32 %s54, 1
      %s56 = scalar_select %p53, %s54, %s55
      %p59 = pneg %p53
      %p60 = scmp.eq.s32.totalorder %s18, 1
      %p61 = por %p59, %p60
      %p62 = scmp.ne.s32.totalorder %s54, %s57
      %p63 = scmp.eq.s32.totalorder %s18, 0
      %p64 = por %p62, %p63
      %p65 = scmp.ne.s32.totalorder %s54, %s57
      %p66 = scmp.eq.s32.totalorder %s23, 1
      %p67 = por %p65, %p66
      %p68 = scmp.ne.s32.totalorder %s57, %s58
      %p69 = scmp.eq.s32.totalorder %s23, 0
      %p70 = por %p68, %p69
      %p71 = scmp.ne.s32.totalorder %s57, %s58
      %p72 = scmp.eq.s32.totalorder %s24, 1
      %p73 = por %p71, %p72
      %p75 = scmp.ne.s32.totalorder %s58, %s74
      %p76 = scmp.eq.s32.totalorder %s24, 0
      %p77 = por %p75, %p76
      %s79 = sadd.s32 %s78, 1
      %p82 = scmp.eq.s32.totalorder %s18, 1
      %p83 = scmp.ne.s32.totalorder %s78, %s80
      %p84 = scmp.eq.s32.totalorder %s18, 0
      %p85 = por %p83, %p84
      %p86 = scmp.ne.s32.totalorder %s78, %s80
      %p87 = scmp.eq.s32.totalorder %s23, 1
      %p88 = por %p86, %p87
      %p89 = scmp.ne.s32.totalorder %s80, %s81
      %p90 = scmp.eq.s32.totalorder %s23, 0
      %p91 = por %p89, %p90
      %p92 = scmp.ne.s32.totalorder %s80, %s81
      %p93 = scmp.eq.s32.totalorder %s24, 1
      %p94 = por %p92, %p93
      %p96 = scmp.ne.s32.totalorder %s81, %s95
      %p97 = scmp.eq.s32.totalorder %s24, 0
      %p98 = por %p96, %p97
      %s100 = sadd.s32 %s99, 1
      %p103 = scmp.eq.s32.totalorder %s18, 1
      %p104 = scmp.ne.s32.totalorder %s99, %s101
      %p105 = scmp.eq.s32.totalorder %s18, 0
      %p106 = por %p104, %p105
      %p107 = scmp.ne.s32.totalorder %s99, %s101
      %p108 = scmp.eq.s32.totalorder %s23, 1
      %p109 = por %p107, %p108
      %p110 = scmp.ne.s32.totalorder %s101, %s102
      %p111 = scmp.eq.s32.totalorder %s23, 0
      %p112 = por %p110, %p111
      %p113 = scmp.ne.s32.totalorder %s101, %s102
      %p114 = scmp.eq.s32.totalorder %s24, 1
      %p115 = por %p113, %p114
      %p117 = scmp.ne.s32.totalorder %s102, %s116
      %p118 = scmp.eq.s32.totalorder %s24, 0
      %p119 = por %p117, %p118
      %s121 = sadd.s32 %s120, 1
      %p124 = scmp.eq.s32.totalorder %s18, 1
      %p125 = scmp.ne.s32.totalorder %s120, %s122
      %p126 = scmp.eq.s32.totalorder %s18, 0
      %p127 = por %p125, %p126
      %p128 = scmp.ne.s32.totalorder %s120, %s122
      %p129 = scmp.eq.s32.totalorder %s23, 1
      %p130 = por %p128, %p129
      %p131 = scmp.ne.s32.totalorder %s122, %s123
      %p132 = scmp.eq.s32.totalorder %s23, 0
      %p133 = por %p131, %p132
      %p134 = scmp.ne.s32.totalorder %s122, %s123
      %p135 = scmp.eq.s32.totalorder %s24, 1
      %p136 = por %p134, %p135
      %p138 = scmp.ne.s32.totalorder %s123, %s137
      %p139 = scmp.eq.s32.totalorder %s24, 0
      %p140 = por %p138, %p139
      %s142 = sadd.s32 %s141, 1
      %p145 = scmp.eq.s32.totalorder %s18, 1
      %p146 = scmp.ne.s32.totalorder %s141, %s143
      %p147 = scmp.eq.s32.totalorder %s18, 0
      %p148 = por %p146, %p147
      %p149 = scmp.ne.s32.totalorder %s141, %s143
      %p150 = scmp.eq.s32.totalorder %s23, 1
      %p151 = por %p149, %p150
      %p152 = scmp.ne.s32.totalorder %s143, %s144
      %p153 = scmp.eq.s32.totalorder %s23, 0
      %p154 = por %p152, %p153
      %p155 = scmp.ne.s32.totalorder %s143, %s144
      %p156 = scmp.eq.s32.totalorder %s24, 1
      %p157 = por %p155, %p156
      %p159 = scmp.ne.s32.totalorder %s144, %s158
      %p160 = scmp.eq.s32.totalorder %s24, 0
      %p161 = por %p159, %p160
      %s163 = sadd.s32 %s162, 1
      %p166 = scmp.eq.s32.totalorder %s18, 1
      %p167 = scmp.ne.s32.totalorder %s162, %s164
      %p168 = scmp.eq.s32.totalorder %s18, 0
      %p169 = por %p167, %p168
      %p170 = scmp.ne.s32.totalorder %s162, %s164
      %p171 = scmp.eq.s32.totalorder %s23, 1
      %p172 = por %p170, %p171
      %p173 = scmp.ne.s32.totalorder %s164, %s165
      %p174 = scmp.eq.s32.totalorder %s23, 0
      %p175 = por %p173, %p174
      %p176 = scmp.ne.s32.totalorder %s164, %s165
      %p177 = scmp.eq.s32.totalorder %s24, 1
      %p178 = por %p176, %p177
      %p180 = scmp.ne.s32.totalorder %s165, %s179
      %p181 = scmp.eq.s32.totalorder %s24, 0
      %p182 = por %p180, %p181
      %s183 = ssub.s32 %s18, %s25
      %p184 = scmp.eq.s32.totalorder %s183, 0
      %s186 = sadd.s32 %s185, 1
      %s187 = scalar_select %p184, %s185, %s186
      %p190 = pneg %p184
      %p191 = scmp.eq.s32.totalorder %s18, 1
      %p192 = por %p190, %p191
      %p193 = scmp.ne.s32.totalorder %s185, %s188
      %p194 = scmp.eq.s32.totalorder %s18, 0
      %p195 = por %p193, %p194
      %p196 = scmp.ne.s32.totalorder %s185, %s188
      %p197 = scmp.eq.s32.totalorder %s23, 1
      %p198 = por %p196, %p197
      %p199 = scmp.ne.s32.totalorder %s188, %s189
      %p200 = scmp.eq.s32.totalorder %s23, 0
      %p201 = por %p199, %p200
      %p202 = scmp.ne.s32.totalorder %s188, %s189
      %p203 = scmp.eq.s32.totalorder %s24, 1
      %p204 = por %p202, %p203
      %p206 = scmp.ne.s32.totalorder %s189, %s205
      %p207 = scmp.eq.s32.totalorder %s24, 0
      %p208 = por %p206, %p207
      %p209 = scmp.le.s32.totalorder 1, %s18
      %p210 = scmp.lt.s32.totalorder %s18, 3
      %p211 = pnand %p209, %p210
      %p212 = pneg %p211
      // Predicated region
      $region9: #{tpu_custom_call.1} parent=5 // pred_check
        _
      $region10: #{tpu_custom_call.1} parent=5 // pred_check_branch
        %214 = sbr.rel (%p211) target = $region12
      $region11: #{tpu_custom_call.1} parent=5 // pred_region
        %s215 = ssub.s32 %s18, 1
        // Predicated region
        $region13: #{tpu_custom_call.1} parent=11 // pred_check
          %p216 = pneg %p91
        $region14: #{tpu_custom_call.1} parent=11 // pred_check_branch
          %218 = sbr.rel (%p216) target = $region16
        $region15: #{tpu_custom_call.1} parent=11 // pred_region
          _
        $region16: #{tpu_custom_call.1} parent=11 // pred_fallthru
          _
        // Predicated region
        $region17: #{tpu_custom_call.1} parent=11 // pred_check
          %p219 = pneg %p112
        $region18: #{tpu_custom_call.1} parent=11 // pred_check_branch
          %221 = sbr.rel (%p219) target = $region20
        $region19: #{tpu_custom_call.1} parent=11 // pred_region
          _
        $region20: #{tpu_custom_call.1} parent=11 // pred_fallthru
          _
        // Predicated region
        $region21: #{tpu_custom_call.1} parent=11 // pred_check
          %p222 = pneg %p133
        $region22: #{tpu_custom_call.1} parent=11 // pred_check_branch
          %224 = sbr.rel (%p222) target = $region24
        $region23: #{tpu_custom_call.1} parent=11 // pred_region
          _
        $region24: #{tpu_custom_call.1} parent=11 // pred_fallthru
          _
        // Predicated region
        $region25: #{tpu_custom_call.1} parent=11 // pred_check
          %p225 = pneg %p154
        $region26: #{tpu_custom_call.1} parent=11 // pred_check_branch
          %227 = sbr.rel (%p225) target = $region28
        $region27: #{tpu_custom_call.1} parent=11 // pred_region
          _
        $region28: #{tpu_custom_call.1} parent=11 // pred_fallthru
          _
        // Predicated region
        $region29: #{tpu_custom_call.1} parent=11 // pred_check
          %p228 = pneg %p175
        $region30: #{tpu_custom_call.1} parent=11 // pred_check_branch
          %230 = sbr.rel (%p228) target = $region32
        $region31: #{tpu_custom_call.1} parent=11 // pred_region
          _
        $region32: #{tpu_custom_call.1} parent=11 // pred_fallthru
          _
      $region12: #{tpu_custom_call.1} parent=5 // pred_fallthru
        _
      %p231 = scmp.lt.s32.totalorder %s18, 2
      // Predicated region
      $region33: #{tpu_custom_call.1} parent=5 // pred_check
        %p232 = pneg %p231
      $region34: #{tpu_custom_call.1} parent=5 // pred_check_branch
        %234 = sbr.rel (%p232) target = $region36
      $region35: #{tpu_custom_call.1} parent=5 // pred_region
        // Predicated region
        $region37: #{tpu_custom_call.1} parent=35 // pred_check
          %p235 = pneg %p38
        $region38: #{tpu_custom_call.1} parent=35 // pred_check_branch
          %237 = sbr.rel (%p235) target = $region40
        $region39: #{tpu_custom_call.1} parent=35 // pred_region
          %s238 = smul.u32 2, %s18
          %p239 = scmp.lt.s32.totalorder %s238, 3
          %s240 = scalar_select %p239, %s238, 3
          %s241 = smul.addr %s240, 2
          %s242 = scalar_lea.vmem %s0, %s241
          %s243 = smul.u32 2, %s18
        $region40: #{tpu_custom_call.1} parent=35 // pred_fallthru
          _
        // Predicated region
        $region41: #{tpu_custom_call.1} parent=35 // pred_check
          %p244 = pneg %p64
        $region42: #{tpu_custom_call.1} parent=35 // pred_check_branch
          %246 = sbr.rel (%p244) target = $region44
        $region43: #{tpu_custom_call.1} parent=35 // pred_region
          %s247 = smul.u32 2, %s18
          %p248 = scmp.lt.s32.totalorder %s247, 3
          %s249 = scalar_select %p248, %s247, 3
          %s250 = smul.addr %s249, 4
          %s251 = scalar_lea.vmem %s1, %s250
          %s252 = smul.u32 2, %s18
        $region44: #{tpu_custom_call.1} parent=35 // pred_fallthru
          _
      $region36: #{tpu_custom_call.1} parent=5 // pred_fallthru
        _
      %p253 = scmp.le.s32.totalorder 1, %s18
      %p254 = scmp.lt.s32.totalorder %s18, 3
      %p255 = pnand %p253, %p254
      %p256 = pneg %p255
      // Predicated region
      $region45: #{tpu_custom_call.1} parent=5 // pred_check
        _
      $region46: #{tpu_custom_call.1} parent=5 // pred_check_branch
        %258 = sbr.rel (%p255) target = $region48
      $region47: #{tpu_custom_call.1} parent=5 // pred_region
        %s259 = ssub.s32 %s18, 1
        %s260 = smul.u32 2, %s23
        %p261 = scmp.lt.s32.totalorder %s260, 3
        %s262 = scalar_select %p261, %s260, 3
        %s263 = smul.addr %s262, 2
        %s264 = scalar_lea.vmem %s0, %s263
        %p265 = pneg %p44
        %p266 = pneg %p41
        %s267 = smul.u32 2, %s23
        %p268 = scmp.lt.s32.totalorder %s267, 3
        %s269 = scalar_select %p268, %s267, 3
        %s270 = smul.addr %s269, 4
        %s271 = scalar_lea.vmem %s1, %s270
        %p272 = pneg %p70
        %p273 = pneg %p67
        %p274 = pneg %p91
        %p275 = pneg %p88
        %p276 = pneg %p112
        %p277 = pneg %p109
        %p278 = pneg %p133
        %p279 = pneg %p130
        %p280 = pneg %p154
        %p281 = pneg %p151
        %p282 = pneg %p175
        %p283 = pneg %p172
        %p284 = pneg %p201
        %p285 = pneg %p198
        %s286 = sand.u32 %s188, 1
        %s287 = scalar_lea.sflag [#allocation4], %s286
        %s288 = sand.u32 %s188, 1
        %s289 = smul.addr %s288, 2
        %s290 = scalar_lea.vmem [#allocation3], %s289
        %s291 = smul.u32 2, %s23
        %p292 = scmp.lt.s32.totalorder %s291, 3
        %s293 = scalar_select %p292, %s291, 3
        %s294 = smul.addr %s293, 2
        %s295 = scalar_lea.vmem %s0, %s294
        %s296 = smul.u32 2, %s23
        %s297 = smul.u32 2, %s23
        %p298 = scmp.lt.s32.totalorder %s297, 3
        %s299 = scalar_select %p298, %s297, 3
        %s300 = smul.addr %s299, 4
        %s301 = scalar_lea.vmem %s1, %s300
        %s302 = smul.u32 2, %s23
        %s303 = smul.u32 2, %s23
        %v304 = vld [vmem:[%s2] sm:$0xff]
        %v305 = vld [vmem:[%s2 + $0x8] sm:$0xff]
        %v306 = vld [vmem:[%s2 + $0x10] sm:$0xff]
        %v307 = vld [vmem:[%s2 + $0x18] sm:$0xff]
        %v308 = vld [vmem:[%s295] sm:$0xf]
        %v309 = vld [vmem:[%s3] sm:$0xff]
        %v310 = vld [vmem:[%s3 + $0x8] sm:$0xff]
        %v311 = vld [vmem:[%s3 + $0x10] sm:$0xff]
        %v312 = vld [vmem:[%s3 + $0x18] sm:$0xff]
        %v313 = vld [vmem:[%s301] sm:$0xff]
        %v315 = vcombine.high %v313, %v313
        %vm316 = vcmask 31744
        %v318 = vsel %vm316, %v309, 0
        %v321 = vsel %vm316, %v310, 0
        %v324 = vsel %vm316, %v311, 0
        %v327 = vsel %vm316, %v312, 0
        %vm329 = vcmask 1043456
        %v330 = vsel %vm329, %v313, 0
        %v332 = vsel %vm329, %v315, 0
        %334 = vmatprep.subr.mxu0 0.0
        %335 = vmatpush1.msra.mxu0 0.0
        %336 = vmatprep.subr.mxu0 0.0
        %337 = vmatpush1.msra.mxu0 0.0
        %338 = vmatprep.subr.mxu0 0.0
        %339 = vmatpush1.msra.mxu0 0.0
        %340 = vmatprep.subr.mxu0 0.0
        %341 = vmatpush1.msra.mxu0 0.0
        %342 = vmatprep.subr.mxu0 0.0
        %343 = vmatpush1.msra.mxu0 0.0
        %344 = vmatprep.subr.mxu0 0.0
        %345 = vmatpush1.msra.mxu0 0.0
        %346 = vmatprep.subr.mxu0 0.0
        %347 = vmatpush1.msra.mxu0 0.0
        %348 = vmatprep.subr.mxu0 0.0
        %349 = vmatpush1.msra.mxu0 0.0
        %350 = vmatprep.subr.mxu0 0.0
        %351 = vmatpush1.msra.mxu0 0.0
        %352 = vmatprep.subr.mxu0 0.0
        %353 = vmatpush1.msra.mxu0 0.0
        %354 = vmatprep.subr.mxu0 0.0
        %355 = vmatpush1.msra.mxu0 0.0
        %356 = vmatprep.subr.mxu0 0.0
        %357 = vmatpush1.msra.mxu0 0.0
        %358 = vmatprep.subr.mxu0 0.0
        %359 = vmatpush1.msra.mxu0 0.0
        %360 = vmatprep.subr.mxu0 0.0
        %361 = vmatpush1.msra.mxu0 0.0
        %362 = vmatprep.subr.mxu0 0.0
        %363 = vmatpush1.msra.mxu0 0.0
        %364 = vmatprep.subr.mxu0 %v332
        %365 = vmatpush1.msra.mxu0 %v330
        %366 = vmatprep.subr.mxu0 0.0
        %367 = vmatpush2.msra.mxu0 0.0
        %368 = vmatprep.subr.mxu0 0.0
        %369 = vmatpush2.msra.mxu0 0.0
        %370 = vmatprep.subr.mxu0 0.0
        %371 = vmatpush2.msra.mxu0 0.0
        %372 = vmatprep.subr.mxu0 0.0
        %373 = vmatpush2.msra.mxu0 0.0
        %374 = vmatprep.subr.mxu0 0.0
        %375 = vmatpush2.msra.mxu0 0.0
        %376 = vmatprep.subr.mxu0 0.0
        %377 = vmatpush2.msra.mxu0 0.0
        %378 = vmatprep.subr.mxu0 0.0
        %379 = vmatpush2.msra.mxu0 0.0
        %380 = vmatprep.subr.mxu0 0.0
        %381 = vmatpush2.msra.mxu0 0.0
        %382 = vmatprep.subr.mxu0 0.0
        %383 = vmatpush2.msra.mxu0 0.0
        %384 = vmatprep.subr.mxu0 0.0
        %385 = vmatpush2.msra.mxu0 0.0
        %386 = vmatprep.subr.mxu0 0.0
        %387 = vmatpush2.msra.mxu0 0.0
        %388 = vmatprep.subr.mxu0 0.0
        %389 = vmatpush2.msra.mxu0 0.0
        %390 = vmatprep.subr.mxu0 0.0
        %391 = vmatpush2.msra.mxu0 0.0
        %392 = vmatprep.subr.mxu0 0.0
        %393 = vmatpush2.msra.mxu0 0.0
        %394 = vmatprep.subr.mxu0 0.0
        %395 = vmatpush2.msra.mxu0 0.0
        %396 = vmatprep.subr.mxu0 0.0
        %397 = vmatpush2.msra.mxu0 0.0
        %398 = vmatprep.mubr.f32.mxu0 0.0
        %399 = vmatmul.mubr.f32.gmra.mxu0 %v318
        %v400 = vpop.f32.mrf.mxu0
        %v401 = vadd.f32 0.0, %v400
        %v402 = vpop.f32.mrf.mxu0
        %v403 = vadd.f32 0.0, %v402
        %404 = vmatprep.mubr.f32.mxu0 0.0
        %405 = vmatmul.mubr.f32.gmra.mxu0 %v321
        %v406 = vpop.f32.mrf.mxu0
        %v407 = vadd.f32 0.0, %v406
        %v408 = vpop.f32.mrf.mxu0
        %v409 = vadd.f32 0.0, %v408
        %410 = vmatprep.mubr.f32.mxu0 0.0
        %411 = vmatmul.mubr.f32.gmra.mxu0 %v324
        %v412 = vpop.f32.mrf.mxu0
        %v413 = vadd.f32 0.0, %v412
        %v414 = vpop.f32.mrf.mxu0
        %v415 = vadd.f32 0.0, %v414
        %416 = vmatprep.mubr.f32.mxu0 0.0
        %417 = vmatmul.mubr.f32.gmra.mxu0 %v327
        %v418 = vpop.f32.mrf.mxu0
        %v419 = vadd.f32 0.0, %v418
        %v420 = vpop.f32.mrf.mxu0
        %v421 = vadd.f32 0.0, %v420
        %422 = vdwg.mxu0
        %v425 = vunpack.c.l.s4 1983009808
        %v426 = vunpack.c.0.s8 %v425
        %v427 = vlaneseq
        %v428 = vshrl.u32 %v427, 7
        %v429 = vsub.s32 %v426, %v428
        %v430 = vrot.slane %v308, %v429
        %v431 = vcombine.high %v430, %v430
        %vm432 = vcmask 15360
        %v434 = vsel %vm432, %v304, 0
        %v437 = vsel %vm432, %v305, 0
        %v440 = vsel %vm432, %v306, 0
        %v443 = vsel %vm432, %v307, 0
        %vm445 = vcmask 1041408
        %v446 = vsel %vm445, %v430, 0
        %v448 = vsel %vm445, %v431, 0
        %450 = vmatprep.subr.mxu0 0.0
        %451 = vmatpush1.msra.mxu0 0.0
        %452 = vmatprep.subr.mxu0 0.0
        %453 = vmatpush1.msra.mxu0 0.0
        %454 = vmatprep.subr.mxu0 0.0
        %455 = vmatpush1.msra.mxu0 0.0
        %456 = vmatprep.subr.mxu0 0.0
        %457 = vmatpush1.msra.mxu0 0.0
        %458 = vmatprep.subr.mxu0 0.0
        %459 = vmatpush1.msra.mxu0 0.0
        %460 = vmatprep.subr.mxu0 0.0
        %461 = vmatpush1.msra.mxu0 0.0
        %462 = vmatprep.subr.mxu0 0.0
        %463 = vmatpush1.msra.mxu0 0.0
        %464 = vmatprep.subr.mxu0 0.0
        %465 = vmatpush1.msra.mxu0 0.0
        %466 = vmatprep.subr.mxu0 0.0
        %467 = vmatpush1.msra.mxu0 0.0
        %468 = vmatprep.subr.mxu0 0.0
        %469 = vmatpush1.msra.mxu0 0.0
        %470 = vmatprep.subr.mxu0 0.0
        %471 = vmatpush1.msra.mxu0 0.0
        %472 = vmatprep.subr.mxu0 0.0
        %473 = vmatpush1.msra.mxu0 0.0
        %474 = vmatprep.subr.mxu0 0.0
        %475 = vmatpush1.msra.mxu0 0.0
        %476 = vmatprep.subr.mxu0 0.0
        %477 = vmatpush1.msra.mxu0 0.0
        %478 = vmatprep.subr.mxu0 0.0
        %479 = vmatpush1.msra.mxu0 0.0
        %480 = vmatprep.subr.mxu0 %v448
        %481 = vmatpush1.msra.mxu0 %v446
        %482 = vmatprep.subr.mxu0 0.0
        %483 = vmatpush2.msra.mxu0 0.0
        %484 = vmatprep.subr.mxu0 0.0
        %485 = vmatpush2.msra.mxu0 0.0
        %486 = vmatprep.subr.mxu0 0.0
        %487 = vmatpush2.msra.mxu0 0.0
        %488 = vmatprep.subr.mxu0 0.0
        %489 = vmatpush2.msra.mxu0 0.0
        %490 = vmatprep.subr.mxu0 0.0
        %491 = vmatpush2.msra.mxu0 0.0
        %492 = vmatprep.subr.mxu0 0.0
        %493 = vmatpush2.msra.mxu0 0.0
        %494 = vmatprep.subr.mxu0 0.0
        %495 = vmatpush2.msra.mxu0 0.0
        %496 = vmatprep.subr.mxu0 0.0
        %497 = vmatpush2.msra.mxu0 0.0
        %498 = vmatprep.subr.mxu0 0.0
        %499 = vmatpush2.msra.mxu0 0.0
        %500 = vmatprep.subr.mxu0 0.0
        %501 = vmatpush2.msra.mxu0 0.0
        %502 = vmatprep.subr.mxu0 0.0
        %503 = vmatpush2.msra.mxu0 0.0
        %504 = vmatprep.subr.mxu0 0.0
        %505 = vmatpush2.msra.mxu0 0.0
        %506 = vmatprep.subr.mxu0 0.0
        %507 = vmatpush2.msra.mxu0 0.0
        %508 = vmatprep.subr.mxu0 0.0
        %509 = vmatpush2.msra.mxu0 0.0
        %510 = vmatprep.subr.mxu0 0.0
        %511 = vmatpush2.msra.mxu0 0.0
        %512 = vmatprep.subr.mxu0 0.0
        %513 = vmatpush2.msra.mxu0 0.0
        %514 = vmatprep.mubr.f32.mxu0 0.0
        %515 = vmatmul.mubr.f32.gmra.mxu0 %v434
        %v516 = vpop.f32.mrf.mxu0
        %v517 = vadd.f32 %v401, %v516
        %v518 = vpop.f32.mrf.mxu0
        %v519 = vadd.f32 %v403, %v518
        %520 = vmatprep.mubr.f32.mxu0 0.0
        %521 = vmatmul.mubr.f32.gmra.mxu0 %v437
        %v522 = vpop.f32.mrf.mxu0
        %v523 = vadd.f32 %v407, %v522
        %v524 = vpop.f32.mrf.mxu0
        %v525 = vadd.f32 %v409, %v524
        %526 = vmatprep.mubr.f32.mxu0 0.0
        %527 = vmatmul.mubr.f32.gmra.mxu0 %v440
        %v528 = vpop.f32.mrf.mxu0
        %v529 = vadd.f32 %v413, %v528
        %v530 = vpop.f32.mrf.mxu0
        %v531 = vadd.f32 %v415, %v530
        %532 = vmatprep.mubr.f32.mxu0 0.0
        %533 = vmatmul.mubr.f32.gmra.mxu0 %v443
        %v534 = vpop.f32.mrf.mxu0
        %v535 = vadd.f32 %v419, %v534
        %v536 = vpop.f32.mrf.mxu0
        %v537 = vadd.f32 %v421, %v536
        %538 = vdwg.mxu0
        %v539 = vld [vmem:[%s4] sm:$0xff]
        %v540 = vld [vmem:[%s4 + $0x8] sm:$0xff]
        %v541 = vld [vmem:[%s4 + $0x10] sm:$0xff]
        %v542 = vld [vmem:[%s4 + $0x18] sm:$0xff]
        %544 = vset.pattern.permute.xlu0 0
        %545 = vperm.xlu0 %544, %v539
        %v546 = vpop.permute.xlu0 %545
        %549 = vset.pattern.permute.xlu0 0
        %550 = vperm.xlu0 %549, %v540
        %v551 = vpop.permute.xlu0 %550
        %554 = vset.pattern.permute.xlu0 0
        %555 = vperm.xlu0 %554, %v541
        %v556 = vpop.permute.xlu0 %555
        %559 = vset.pattern.permute.xlu0 0
        %560 = vperm.xlu0 %559, %v542
        %v561 = vpop.permute.xlu0 %560
        %v563 = vadd.f32 %v517, %v546
        %v564 = vadd.f32 %v519, %v546
        %v565 = vadd.f32 %v523, %v551
        %v566 = vadd.f32 %v525, %v551
        %v567 = vadd.f32 %v529, %v556
        %v568 = vadd.f32 %v531, %v556
        %v569 = vadd.f32 %v535, %v561
        %v570 = vadd.f32 %v537, %v561
        %v571 = vmax.f32 %v563, 0.0
        %v572 = vmax.f32 %v564, 0.0
        %v573 = vmax.f32 %v565, 0.0
        %v574 = vmax.f32 %v566, 0.0
        %v575 = vmax.f32 %v567, 0.0
        %v576 = vmax.f32 %v568, 0.0
        %v577 = vmax.f32 %v569, 0.0
        %v578 = vmax.f32 %v570, 0.0
        %v579 = vld [vmem:[%s5] sm:$0x1]
        %v580 = vld [vmem:[#allocation2] sm:$0x1]
        %582 = vset.pattern.permute.xlu0 0
        %583 = vperm.xlu0 %582, %v580
        %v584 = vpop.permute.xlu0 %583
        %v586 = vlaneseq
        %v587 = vshrl.u32 %v586, 7
        %v588 = vsub.s32 0, %v587
        %v589 = vrot.slane %v584, %v588
        %vm590 = vcmask 261120
        %v592 = vsel %vm590, %v579, 0
        %594 = vmatprep.subr.mxu0 0.0
        %595 = vmatpush1.msra.mxu0 0.0
        %596 = vmatprep.subr.mxu0 0.0
        %597 = vmatpush1.msra.mxu0 0.0
        %598 = vmatprep.subr.mxu0 0.0
        %599 = vmatpush1.msra.mxu0 0.0
        %600 = vmatprep.subr.mxu0 0.0
        %601 = vmatpush1.msra.mxu0 0.0
        %602 = vmatprep.subr.mxu0 0.0
        %603 = vmatpush1.msra.mxu0 0.0
        %604 = vmatprep.subr.mxu0 0.0
        %605 = vmatpush1.msra.mxu0 0.0
        %606 = vmatprep.subr.mxu0 0.0
        %607 = vmatpush1.msra.mxu0 0.0
        %608 = vmatprep.subr.mxu0 0.0
        %609 = vmatpush1.msra.mxu0 0.0
        %610 = vmatprep.subr.mxu0 0.0
        %611 = vmatpush1.msra.mxu0 0.0
        %612 = vmatprep.subr.mxu0 0.0
        %613 = vmatpush1.msra.mxu0 0.0
        %614 = vmatprep.subr.mxu0 0.0
        %615 = vmatpush1.msra.mxu0 0.0
        %616 = vmatprep.subr.mxu0 0.0
        %617 = vmatpush1.msra.mxu0 0.0
        %618 = vmatprep.subr.mxu0 %v578
        %619 = vmatpush1.msra.mxu0 %v577
        %620 = vmatprep.subr.mxu0 %v576
        %621 = vmatpush1.msra.mxu0 %v575
        %622 = vmatprep.subr.mxu0 %v574
        %623 = vmatpush1.msra.mxu0 %v573
        %624 = vmatprep.subr.mxu0 %v572
        %625 = vmatpush1.msra.mxu0 %v571
        %626 = vmatprep.subr.mxu0 0.0
        %627 = vmatpush2.msra.mxu0 0.0
        %628 = vmatprep.subr.mxu0 0.0
        %629 = vmatpush2.msra.mxu0 0.0
        %630 = vmatprep.subr.mxu0 0.0
        %631 = vmatpush2.msra.mxu0 0.0
        %632 = vmatprep.subr.mxu0 0.0
        %633 = vmatpush2.msra.mxu0 0.0
        %634 = vmatprep.subr.mxu0 0.0
        %635 = vmatpush2.msra.mxu0 0.0
        %636 = vmatprep.subr.mxu0 0.0
        %637 = vmatpush2.msra.mxu0 0.0
        %638 = vmatprep.subr.mxu0 0.0
        %639 = vmatpush2.msra.mxu0 0.0
        %640 = vmatprep.subr.mxu0 0.0
        %641 = vmatpush2.msra.mxu0 0.0
        %642 = vmatprep.subr.mxu0 0.0
        %643 = vmatpush2.msra.mxu0 0.0
        %644 = vmatprep.subr.mxu0 0.0
        %645 = vmatpush2.msra.mxu0 0.0
        %646 = vmatprep.subr.mxu0 0.0
        %647 = vmatpush2.msra.mxu0 0.0
        %648 = vmatprep.subr.mxu0 0.0
        %649 = vmatpush2.msra.mxu0 0.0
        %650 = vmatprep.subr.mxu0 0.0
        %651 = vmatpush2.msra.mxu0 0.0
        %652 = vmatprep.subr.mxu0 0.0
        %653 = vmatpush2.msra.mxu0 0.0
        %654 = vmatprep.subr.mxu0 0.0
        %655 = vmatpush2.msra.mxu0 0.0
        %656 = vmatprep.subr.mxu0 0.0
        %657 = vmatpush2.msra.mxu0 0.0
        %658 = vmatprep.mubr.f32.mxu0 0.0
        %659 = vmatmul.mubr.f32.gmra.mxu0 %v592
        %v660 = vpop.f32.mrf.mxu0
        %v661 = vadd.f32 %v589, %v660
        %v662 = vpop.f32.mrf.mxu0
        %v663 = vadd.f32 %v589, %v662
        %664 = vdwg.mxu0
        %v667 = vcombine.low %v661, %v663
        %v669 = vunpack.c.l.s4 1966171168
        %v670 = vunpack.c.0.s8 %v669
        %v671 = vlaneseq
        %v672 = vshrl.u32 %v671, 7
        %v673 = vsub.s32 %v670, %v672
        %v674 = vrot.slane %v667, %v673
        %v676 = vunpack.c.l.s4 1966171168
        %v677 = vunpack.c.0.s8 %v676
        %v678 = vlaneseq
        %v679 = vshrl.u32 %v678, 7
        %v680 = vsub.s32 %v677, %v679
        %v681 = vrot.slane %v674, %v680
        %v683 = vlaneseq
        %vm684 = vcmp.ge.s32.totalorder %v683, 0
        %vm685 = vcmp.lt.s32.totalorder %v683, 256
        %vm686 = vmand %vm684, %vm685
        %687 = vst.msk [vmem:[%s290] sm:$0x3] %vm686, %v681
        %s688 = sand.u32 %s188, 1
        %s689 = scalar_lea.sflag [#allocation4], %s688
        %s690 = sand.u32 %s188, 1
        %s691 = smul.addr %s690, 2
        %s692 = scalar_lea.vmem [#allocation3], %s691
        // Predicated region
        $region49: #{tpu_custom_call.1} parent=47 // pred_check
          %p693 = pneg %p198
        $region50: #{tpu_custom_call.1} parent=47 // pred_check_branch
          %695 = sbr.rel (%p693) target = $region52
        $region51: #{tpu_custom_call.1} parent=47 // pred_region
          %s696 = smul.u32 2, %s23
          %s698 = ssub.s32 32, 32
          %699 = vsyncadd %s689, %s698
          %s700 = smul.addr %s696, 16
          %s701 = scalar_lea.hbm %s7, %s700
          %s703 = sshll.u32 %s692, 4
          %s704 = int_to_ptr.vmem [resolvable:$true] %s703
          %706 = dma.vmem_to_hbm [thread:$0]  %s704, 32, %s701, %s689
        $region52: #{tpu_custom_call.1} parent=47 // pred_fallthru
          _
      $region48: #{tpu_custom_call.1} parent=5 // pred_fallthru
        _
      %p707 = scmp.le.s32.totalorder 2, %s18
      // Predicated region
      $region53: #{tpu_custom_call.1} parent=5 // pred_check
        %p708 = pneg %p707
      $region54: #{tpu_custom_call.1} parent=5 // pred_check_branch
        %710 = sbr.rel (%p708) target = $region56
      $region55: #{tpu_custom_call.1} parent=5 // pred_region
        %s711 = ssub.s32 %s18, 2
        // Predicated region
        $region57: #{tpu_custom_call.1} parent=55 // pred_check
          %p712 = pneg %p204
        $region58: #{tpu_custom_call.1} parent=55 // pred_check_branch
          %714 = sbr.rel (%p712) target = $region60
        $region59: #{tpu_custom_call.1} parent=55 // pred_region
          %s715 = sand.u32 %s189, 1
          %s716 = scalar_lea.sflag [#allocation4], %s715
          %s717 = sand.u32 %s189, 1
          %s718 = smul.addr %s717, 2
          %s719 = scalar_lea.vmem [#allocation3], %s718
          %720 = dma.done %s716, 32
        $region60: #{tpu_custom_call.1} parent=55 // pred_fallthru
          _
      $region56: #{tpu_custom_call.1} parent=5 // pred_fallthru
        _
    $region6: #{tpu_custom_call.1} parent=1 // loop_footer
      %s22 = sadd.s32 1, %s18
    $region7: #{tpu_custom_call.1} parent=1 // loop_footer_branch
      %17 = sbr.rel target = $region3
    $region8: #{tpu_custom_call.1} parent=1 // loop_exit
      _
    %721 = vsyncpa [#allocation4], 1
    %s722 = scalar_lea.sflag [#allocation4], 1
    %723 = vsyncpa %s722, 1

</llo_original>
